<compile_context>
chip_gen: v7x
topology: tpu7x:2x2x1
jax: 0.10.0
libtpu: 0.0.40
codegen_flags: <defaults>
</compile_context>

<pallas_src>
import functools

import jax
import jax.numpy as jnp
from jax.experimental import pallas as pl
from jax.experimental.pallas import tpu as pltpu

# ----------------------------- configuration ---------------------------------
HIDDEN_SIZE = 32       # model_config.hidden_size
NUM_EVENT_TYPES = 4    # model_config.num_event_types
NUM_MLP_LAYERS = 2     # model_specs['num_mlp_layers']  (=> 1 extra hidden Linear)
BATCH = 2
SEQ = 8
TILE_N = 8192          # rows per grid step (lane axis); sweep 2048-8192; multiple of 128
EPS = float(jnp.finfo(jnp.float32).eps)


# ------------------------------- kernel --------------------------------------
def _chfn_kernel(num_mlp_layers, hidden_size, num_event_types,
                 hidden_ref, dt_ref, wstack_ref, vecs_ref, head_ref, out_ref):
    H, K = hidden_size, num_event_types

    # tiny resident weight slabs (constant index_map -> DMA'd once, stay in VMEM)
    vecs = vecs_ref[...]                      # (H, 3 + (L-1))
    dz1 = vecs[:, 0:1]                        # d z1 / d dt           (H, 1)
    dz1n = vecs[:, 1:2]                       # dz1 / (B*S)  grad-of-mean seed
    c = vecs[:, 2:3]                          # W2b @ b1 + b2         (H, 1)
    head = head_ref[...]                      # (K, H + 3)
    w3 = head[:, :H]                          # (K, H)
    b3 = head[:, H:H + 1]                     # (K, 1)
    bias = head[:, H + 1:H + 2]               # (K, 1)
    bias_n = head[:, H + 2:H + 3]             # bias / (B*S)

    dt = dt_ref[...]                          # (1, T)

    # lane-dense orientation: batch rows on the 128-lane axis, H=32 on sublanes.
    # layer_dense_1 folded into layer_dense_2: z1 = W2a @ h^T + dz1*dt + c
    z1 = (jnp.dot(wstack_ref[0], hidden_ref[...].T,
                  preferred_element_type=jnp.float32)
          + dz1 * dt + c)                     # (H, T)
    out = jnp.tanh(z1)
    dout = (1.0 - out * out) * dz1n           # forward-mode derivative (already / N)

    # extra tanh MLP layers: two small dots per shared weight (no lane concat copies)
    for l in range(num_mlp_layers - 1):
        wl = wstack_ref[l + 1]                # (H, H)
        bl = vecs[:, 3 + l:4 + l]             # (H, 1)
        zv = jnp.dot(wl, out, preferred_element_type=jnp.float32) + bl
        zd = jnp.dot(wl, dout, preferred_element_type=jnp.float32)
        out = jnp.tanh(zv)
        dout = (1.0 - out * out) * zd

    # layer_dense_3 head: Linear(H -> K), value + derivative
    z3 = jnp.dot(w3, out, preferred_element_type=jnp.float32) + b3      # (K, T)
    dz3 = jnp.dot(w3, dout, preferred_element_type=jnp.float32)         # (K, T)

    # softplus + sigmoid sharing a single exp(-|z3|)
    e = jnp.exp(-jnp.abs(z3))
    softplus = jnp.maximum(z3, 0.0) + jnp.log1p(e)
    inv1pe = 1.0 / (1.0 + e)
    sigmoid = jnp.where(z3 >= 0.0, inv1pe, e * inv1pe)

    integral = softplus + bias * dt           # (K, T)
    deriv = sigmoid * dz3 + bias_n            # (K, T), includes the 1/(B*S) of .mean()

    out_ref[...] = jnp.concatenate([integral, deriv], axis=0)   # (2K, T) lane-dense store


# ------------------------------- wrapper --------------------------------------
def cumul_hazard_forward(hidden_states, time_delta_seqs, params,
                         num_mlp_layers=NUM_MLP_LAYERS, tile_n_cap=TILE_N):
    B, S, H = hidden_states.shape
    K = params["bias_term"].shape[0]
    L = num_mlp_layers
    N = B * S

    # ----- tile-size selection: multiple of 128, clamped to problem, >=2 steps for v7x ---
    n128 = ((N + 127) // 128) * 128
    tile_n = max(128, (min(tile_n_cap, n128) // 128) * 128)
    if n128 >= 256 and pl.cdiv(n128, tile_n) < 2:
        tile_n = ((n128 // 2 + 127) // 128) * 128     # give both v7x TensorCores work
    assert tile_n % 128 == 0
    n_tiles = pl.cdiv(N, tile_n)
    n_out = n_tiles * tile_n        # padded output lane dim (kernel writes full tiles anyway)

    # ----- inputs in natural layout: reshape only (no HBM transpose / big-pad copies) ----
    hidden_f = hidden_states.reshape(N, H).astype(jnp.float32)    # (N, H), free reshape
    dt_row = time_delta_seqs.reshape(1, N).astype(jnp.float32)    # (1, N), free reshape
    if N < tile_n:
        # tiny single-tile case: cheap pad; larger ragged tails use Pallas boundary masking
        pad = tile_n - N
        hidden_f = jnp.pad(hidden_f, ((0, pad), (0, 0)))
        dt_row = jnp.pad(dt_row, ((0, 0), (0, pad)))

    # ----- fold layer_dense_1 into layer_dense_2 and pack the tiny weights ---------------
    f32 = jnp.float32
    w2 = params["w2"].astype(f32)                                  # (H, 2H)
    w2a, w2b = w2[:, :H], w2[:, H:]
    dz1 = w2b @ params["w1"].astype(f32)                           # (H, 1) d z1 / d dt
    c = w2b @ params["b1"].astype(f32) + params["b2"].astype(f32)  # (H, 1)
    inv_n = 1.0 / N                                                # grad-of-mean factor
    wstack = jnp.concatenate(
        [w2a[None], params["wmlp"].astype(f32)[:max(L - 1, 0)]], axis=0)     # (L, H, H)
    vecs = jnp.concatenate(
        [dz1, dz1 * inv_n, c]
        + [params["bmlp"][l].astype(f32) for l in range(L - 1)], axis=1)     # (H, 3+L-1)
    bias = params["bias_term"].astype(f32)                         # (K, 1)
    head = jnp.concatenate(
        [params["w3"].astype(f32), params["b3"].astype(f32), bias, bias * inv_n],
        axis=1)                                                    # (K, H+3)

    kernel = functools.partial(_chfn_kernel, L, H, K)

    # advisory cost estimate with real flops / bytes
    flops = int(n_out * (2 * H * H + (L - 1) * 4 * H * H + 4 * K * H + 20 * H + 12 * K))
    transc = int(n_out * (L * H + 2 * K))
    w_bytes = 4 * int(wstack.size + vecs.size + head.size)
    bytes_acc = int(N * (H + 1) * 4 + n_out * 2 * K * 4 + w_bytes)

    merged = pl.pallas_call(
        kernel,
        out_shape=jax.ShapeDtypeStruct((2 * K, n_out), jnp.float32),
        grid=(n_tiles,),
        in_specs=[
            pl.BlockSpec((tile_n, H), lambda i: (i, 0)),        # hidden rows (pipelined)
            pl.BlockSpec((1, tile_n), lambda i: (0, i)),        # time deltas
            pl.BlockSpec(wstack.shape, lambda i: (0, 0, 0)),    # resident weight stacks
            pl.BlockSpec(vecs.shape, lambda i: (0, 0)),
            pl.BlockSpec(head.shape, lambda i: (0, 0)),
        ],
        out_specs=pl.BlockSpec((2 * K, tile_n), lambda i: (0, i)),
        compiler_params=pltpu.CompilerParams(
            dimension_semantics=("parallel",),
            vmem_limit_bytes=32 * 1024 * 1024),
        cost_estimate=pl.CostEstimate(
            flops=flops, transcendentals=transc, bytes_accessed=bytes_acc),
    )(hidden_f, dt_row, wstack, vecs, head)

    integral = merged[:K, :N].T.reshape(B, S, K)
    deriv = merged[K:, :N].T.reshape(B, S, K)
    return integral, deriv


# --------------------------- deterministic params ------------------------------
def init_params(key, hidden_size=HIDDEN_SIZE, num_event_types=NUM_EVENT_TYPES,
                num_mlp_layers=NUM_MLP_LAYERS):
    # mimic nn.Linear uniform init followed by init_weights_positive (abs + clamp(eps));
    # weights kept in torch (out_features, in_features) layout.
    def pos(k, shape, fan_in):
        bound = 1.0 / jnp.sqrt(jnp.float32(fan_in))
        v = jax.random.uniform(k, shape, jnp.float32, -bound, bound)
        return jnp.clip(jnp.abs(v), EPS, None)

    ks = jax.random.split(key, 8)
    H, K, L = hidden_size, num_event_types, num_mlp_layers
    params = {
        "bias_term": jnp.ones((K, 1), jnp.float32),        # nn.Parameter(torch.ones(K))
        "w1": pos(ks[0], (H, 1), 1),                       # Linear(1, H)
        "b1": pos(ks[1], (H, 1), 1),
        "w2": pos(ks[2], (H, 2 * H), 2 * H),               # Linear(2H, H)
        "b2": pos(ks[3], (H, 1), 2 * H),
        "wmlp": pos(ks[4], (max(L - 1, 1), H, H), H),      # ModuleList Linear(H, H)
        "bmlp": pos(ks[5], (max(L - 1, 1), H, 1), H),
        "w3": pos(ks[6], (K, H), H),                       # Linear(H, K)
        "b3": pos(ks[7], (K, 1), H),
    }
    return params


# ------------------------------ pure-JAX reference -----------------------------
def reference_forward(hidden_states, time_delta_seqs, params,
                      num_mlp_layers=NUM_MLP_LAYERS):
    B, S, H = hidden_states.shape
    K = params["bias_term"].shape[0]
    N = B * S
    h_flat = hidden_states.reshape(N, H)
    t_flat = time_delta_seqs.reshape(N)

    def lam(t_scalar, h_vec):
        t_feat = params["w1"][:, 0] * t_scalar + params["b1"][:, 0]
        x = jnp.concatenate([h_vec, t_feat])
        out = jnp.tanh(params["w2"] @ x + params["b2"][:, 0])
        for l in range(num_mlp_layers - 1):
            out = jnp.tanh(params["wmlp"][l] @ out + params["bmlp"][l, :, 0])
        z3 = params["w3"] @ out + params["b3"][:, 0]
        return jax.nn.softplus(z3) + params["bias_term"][:, 0] * t_scalar

    integral = jax.vmap(lam)(t_flat, h_flat)                            # (N, K)
    # grad of the mean over B*S for each event type -> (1/N) * dLambda_i/dt
    deriv = jax.vmap(jax.jacfwd(lam, argnums=0))(t_flat, h_flat) / N
    return integral.reshape(B, S, K), deriv.reshape(B, S, K)


# ----------------------------------- main --------------------------------------
if __name__ == "__main__":
    key = jax.random.PRNGKey(0)
    k_param, k_hid, k_dt = jax.random.split(key, 3)

    params = init_params(k_param)
    hidden_states = jax.random.normal(k_hid, (BATCH, SEQ, HIDDEN_SIZE), jnp.float32)
    time_delta_seqs = jax.random.uniform(k_dt, (BATCH, SEQ), jnp.float32, 0.01, 2.0)

    integral, deriv = cumul_hazard_forward(hidden_states, time_delta_seqs, params)
    jax.block_until_ready((integral, deriv))

    ref_integral, ref_deriv = reference_forward(hidden_states, time_delta_seqs, params)
    assert integral.shape == (BATCH, SEQ, NUM_EVENT_TYPES)
    assert deriv.shape == (BATCH, SEQ, NUM_EVENT_TYPES)
    assert jnp.allclose(integral, ref_integral, rtol=1e-4, atol=1e-5), "integral mismatch"
    assert jnp.allclose(deriv, ref_deriv, rtol=1e-4, atol=1e-6), "derivative mismatch"

    print("KERNEL_OK")
</pallas_src>

<mosaic_0001>
module attributes {stable_mosaic.version = 11 : i64} {
  func.func @_chfn_kernel(%arg0: i32, %arg1: memref<128x32xf32, #tpu.memory_space<vmem>>, %arg2: memref<1x128xf32, #tpu.memory_space<vmem>>, %arg3: memref<2x32x32xf32, #tpu.memory_space<vmem>>, %arg4: memref<32x4xf32, #tpu.memory_space<vmem>>, %arg5: memref<4x35xf32, #tpu.memory_space<vmem>>, %arg6: memref<8x128xf32, #tpu.memory_space<vmem>>) attributes {dimension_semantics = [#tpu.dimension_semantics<parallel>], iteration_bounds = array<i64: 1>, scalar_prefetch = 0 : i64, scratch_operands = 0 : i64, tpu.core_type = #tpu.core_type<tc>, window_params = [{transform_indices = @transform_0, window_bounds = array<i64: 128, 32>}, {transform_indices = @transform_1, window_bounds = array<i64: 1, 128>}, {pipeline_mode = #tpu.pipeline_mode<synchronous>, transform_indices = @transform_2, window_bounds = array<i64: 2, 32, 32>}, {pipeline_mode = #tpu.pipeline_mode<synchronous>, transform_indices = @transform_3, window_bounds = array<i64: 32, 4>}, {pipeline_mode = #tpu.pipeline_mode<synchronous>, transform_indices = @transform_4, window_bounds = array<i64: 4, 35>}, {transform_indices = @transform_5, window_bounds = array<i64: 8, 128>}]} {
    %c0 = arith.constant 0 : index
    %c0_0 = arith.constant 0 : index
    %0 = vector.load %arg4[%c0, %c0_0] : memref<32x4xf32, #tpu.memory_space<vmem>>, vector<32x4xf32>
    %1 = vector.extract_strided_slice %0 {offsets = [0, 0], sizes = [32, 1], strides = [1, 1]} : vector<32x4xf32> to vector<32x1xf32>
    %2 = vector.extract_strided_slice %0 {offsets = [0, 1], sizes = [32, 1], strides = [1, 1]} : vector<32x4xf32> to vector<32x1xf32>
    %3 = vector.extract_strided_slice %0 {offsets = [0, 2], sizes = [32, 1], strides = [1, 1]} : vector<32x4xf32> to vector<32x1xf32>
    %c0_1 = arith.constant 0 : index
    %c0_2 = arith.constant 0 : index
    %4 = vector.load %arg5[%c0_1, %c0_2] : memref<4x35xf32, #tpu.memory_space<vmem>>, vector<4x35xf32>
    %5 = vector.extract_strided_slice %4 {offsets = [0, 0], sizes = [4, 32], strides = [1, 1]} : vector<4x35xf32> to vector<4x32xf32>
    %6 = vector.extract_strided_slice %4 {offsets = [0, 32], sizes = [4, 1], strides = [1, 1]} : vector<4x35xf32> to vector<4x1xf32>
    %7 = vector.extract_strided_slice %4 {offsets = [0, 33], sizes = [4, 1], strides = [1, 1]} : vector<4x35xf32> to vector<4x1xf32>
    %8 = vector.extract_strided_slice %4 {offsets = [0, 34], sizes = [4, 1], strides = [1, 1]} : vector<4x35xf32> to vector<4x1xf32>
    %c0_3 = arith.constant 0 : index
    %c0_4 = arith.constant 0 : index
    %9 = vector.load %arg2[%c0_3, %c0_4] : memref<1x128xf32, #tpu.memory_space<vmem>>, vector<1x128xf32>
    %c0_5 = arith.constant 0 : index
    %c0_6 = arith.constant 0 : index
    %c0_7 = arith.constant 0 : index
    %10 = vector.load %arg3[%c0_5, %c0_6, %c0_7] : memref<2x32x32xf32, #tpu.memory_space<vmem>>, vector<1x32x32xf32>
    %11 = vector.shape_cast %10 : vector<1x32x32xf32> to vector<32x32xf32>
    %c0_8 = arith.constant 0 : index
    %c0_9 = arith.constant 0 : index
    %12 = vector.load %arg1[%c0_8, %c0_9] : memref<128x32xf32, #tpu.memory_space<vmem>>, vector<128x32xf32>
    %13 = tpu.transpose %12, [1, 0] : vector<128x32xf32> -> vector<32x128xf32>
    %cst = arith.constant dense<0.000000e+00> : vector<32x128xf32>
    %14 = tpu.matmul %11, %13, %cst {dimension_numbers = #tpu.dot_dimension_numbers<[1], [0], [0], [1], [0, 0, 1, 1], [], []>} : vector<32x32xf32>, vector<32x128xf32>, vector<32x128xf32> -> vector<32x128xf32>
    %15 = vector.broadcast %1 : vector<32x1xf32> to vector<32x128xf32>
    %16 = vector.broadcast %9 : vector<1x128xf32> to vector<32x128xf32>
    %17 = arith.mulf %15, %16 : vector<32x128xf32>
    %18 = arith.addf %14, %17 : vector<32x128xf32>
    %19 = vector.broadcast %3 : vector<32x1xf32> to vector<32x128xf32>
    %20 = arith.addf %18, %19 : vector<32x128xf32>
    %21 = math.tanh %20 : vector<32x128xf32>
    %22 = arith.mulf %21, %21 : vector<32x128xf32>
    %cst_10 = arith.constant 1.000000e+00 : f32
    %23 = vector.broadcast %cst_10 : f32 to vector<32x128xf32>
    %24 = arith.subf %23, %22 : vector<32x128xf32>
    %25 = vector.broadcast %2 : vector<32x1xf32> to vector<32x128xf32>
    %26 = arith.mulf %24, %25 : vector<32x128xf32>
    %c1 = arith.constant 1 : index
    %c0_11 = arith.constant 0 : index
    %c0_12 = arith.constant 0 : index
    %27 = vector.load %arg3[%c1, %c0_11, %c0_12] : memref<2x32x32xf32, #tpu.memory_space<vmem>>, vector<1x32x32xf32>
    %28 = vector.shape_cast %27 : vector<1x32x32xf32> to vector<32x32xf32>
    %29 = vector.extract_strided_slice %0 {offsets = [0, 3], sizes = [32, 1], strides = [1, 1]} : vector<32x4xf32> to vector<32x1xf32>
    %cst_13 = arith.constant dense<0.000000e+00> : vector<32x128xf32>
    %30 = tpu.matmul %28, %21, %cst_13 {dimension_numbers = #tpu.dot_dimension_numbers<[1], [0], [0], [1], [0, 0, 1, 1], [], []>} : vector<32x32xf32>, vector<32x128xf32>, vector<32x128xf32> -> vector<32x128xf32>
    %31 = vector.broadcast %29 : vector<32x1xf32> to vector<32x128xf32>
    %32 = arith.addf %30, %31 : vector<32x128xf32>
    %cst_14 = arith.constant dense<0.000000e+00> : vector<32x128xf32>
    %33 = tpu.matmul %28, %26, %cst_14 {dimension_numbers = #tpu.dot_dimension_numbers<[1], [0], [0], [1], [0, 0, 1, 1], [], []>} : vector<32x32xf32>, vector<32x128xf32>, vector<32x128xf32> -> vector<32x128xf32>
    %34 = math.tanh %32 : vector<32x128xf32>
    %35 = arith.mulf %34, %34 : vector<32x128xf32>
    %cst_15 = arith.constant 1.000000e+00 : f32
    %36 = vector.broadcast %cst_15 : f32 to vector<32x128xf32>
    %37 = arith.subf %36, %35 : vector<32x128xf32>
    %38 = arith.mulf %37, %33 : vector<32x128xf32>
    %cst_16 = arith.constant dense<0.000000e+00> : vector<4x128xf32>
    %39 = tpu.matmul %5, %34, %cst_16 {dimension_numbers = #tpu.dot_dimension_numbers<[1], [0], [0], [1], [0, 0, 1, 1], [], []>} : vector<4x32xf32>, vector<32x128xf32>, vector<4x128xf32> -> vector<4x128xf32>
    %40 = vector.broadcast %6 : vector<4x1xf32> to vector<4x128xf32>
    %41 = arith.addf %39, %40 : vector<4x128xf32>
    %cst_17 = arith.constant dense<0.000000e+00> : vector<4x128xf32>
    %42 = tpu.matmul %5, %38, %cst_17 {dimension_numbers = #tpu.dot_dimension_numbers<[1], [0], [0], [1], [0, 0, 1, 1], [], []>} : vector<4x32xf32>, vector<32x128xf32>, vector<4x128xf32> -> vector<4x128xf32>
    %43 = math.absf %41 : vector<4x128xf32>
    %cst_18 = arith.constant 0.000000e+00 : f32
    %44 = vector.broadcast %cst_18 : f32 to vector<4x128xf32>
    %45 = arith.subf %44, %43 : vector<4x128xf32>
    %46 = math.exp %45 : vector<4x128xf32>
    %cst_19 = arith.constant 0.000000e+00 : f32
    %47 = vector.broadcast %cst_19 : f32 to vector<4x128xf32>
    %48 = arith.maximumf %41, %47 : vector<4x128xf32>
    %49 = math.log1p %46 : vector<4x128xf32>
    %50 = arith.addf %48, %49 : vector<4x128xf32>
    %cst_20 = arith.constant 1.000000e+00 : f32
    %51 = vector.broadcast %cst_20 : f32 to vector<4x128xf32>
    %52 = arith.addf %51, %46 : vector<4x128xf32>
    %cst_21 = arith.constant 1.000000e+00 : f32
    %53 = vector.broadcast %cst_21 : f32 to vector<4x128xf32>
    %54 = arith.divf %53, %52 : vector<4x128xf32>
    %cst_22 = arith.constant 0.000000e+00 : f32
    %55 = vector.broadcast %cst_22 : f32 to vector<4x128xf32>
    %56 = arith.cmpf oge, %41, %55 : vector<4x128xf32>
    %57 = arith.mulf %46, %54 : vector<4x128xf32>
    %58 = arith.select %56, %54, %57 : vector<4x128xi1>, vector<4x128xf32>
    %59 = vector.broadcast %7 : vector<4x1xf32> to vector<4x128xf32>
    %60 = vector.broadcast %9 : vector<1x128xf32> to vector<4x128xf32>
    %61 = arith.mulf %59, %60 : vector<4x128xf32>
    %62 = arith.addf %50, %61 : vector<4x128xf32>
    %63 = arith.mulf %58, %42 : vector<4x128xf32>
    %64 = vector.broadcast %8 : vector<4x1xf32> to vector<4x128xf32>
    %65 = arith.addf %63, %64 : vector<4x128xf32>
    %66 = tpu.concatenate %62, %65 in 0 : vector<4x128xf32>, vector<4x128xf32> -> vector<8x128xf32>
    %c0_23 = arith.constant 0 : index
    %c0_24 = arith.constant 0 : index
    %67 = vector.load %arg6[%c0_23, %c0_24] : memref<8x128xf32, #tpu.memory_space<vmem>>, vector<8x128xf32>
    tpu.vector_store %arg6[%c0_23, %c0_24], %66 {strides = array<i32>} : memref<8x128xf32, #tpu.memory_space<vmem>>, vector<8x128xf32>,
    return
  }
  func.func @transform_0(%arg0: i32) -> (i32, i32) {
    %c0_i32 = arith.constant 0 : i32
    %c0_i32_0 = arith.constant 0 : i32
    return %arg0, %c0_i32 : i32, i32
  }
  func.func @transform_1(%arg0: i32) -> (i32, i32) {
    %c0_i32 = arith.constant 0 : i32
    %c0_i32_0 = arith.constant 0 : i32
    return %c0_i32, %arg0 : i32, i32
  }
  func.func @transform_2(%arg0: i32) -> (i32, i32, i32) {
    %c0_i32 = arith.constant 0 : i32
    %c0_i32_0 = arith.constant 0 : i32
    %c0_i32_1 = arith.constant 0 : i32
    %c0_i32_2 = arith.constant 0 : i32
    return %c0_i32, %c0_i32_0, %c0_i32_1 : i32, i32, i32
  }
  func.func @transform_3(%arg0: i32) -> (i32, i32) {
    %c0_i32 = arith.constant 0 : i32
    %c0_i32_0 = arith.constant 0 : i32
    %c0_i32_1 = arith.constant 0 : i32
    return %c0_i32, %c0_i32_0 : i32, i32
  }
  func.func @transform_4(%arg0: i32) -> (i32, i32) {
    %c0_i32 = arith.constant 0 : i32
    %c0_i32_0 = arith.constant 0 : i32
    %c0_i32_1 = arith.constant 0 : i32
    return %c0_i32, %c0_i32_0 : i32, i32
  }
  func.func @transform_5(%arg0: i32) -> (i32, i32) {
    %c0_i32 = arith.constant 0 : i32
    %c0_i32_0 = arith.constant 0 : i32
    return %c0_i32, %arg0 : i32, i32
  }
}

</mosaic_0001>

<llo_original>
// kernel: tpu_custom_call.1
$region0: #{tpu_custom_call.1}
  #allocation0 [shape = 'u32[]', space=smem, size = 0x4, offset = 0x4, fixed_abs, tag = 'smem constant byte address 0x4 - core index']
  #allocation1 [shape = 'u32[144,128]{1,0:T(1,128)}', space=vmem, size = 0x12000, scoped, tag = 'internal scratch']
  %s0 = inlined_call_operand.vmem [shape: f32[128,32], index: 0, kind: input, shape index: {}]
  %s1 = inlined_call_operand.vmem [shape: f32[1,128], index: 1, kind: input, shape index: {}]
  %s2 = inlined_call_operand.vmem [shape: f32[2,32,32], index: 2, kind: input, shape index: {}]
  %s3 = inlined_call_operand.vmem [shape: f32[32,4], index: 3, kind: input, shape index: {}]
  %s4 = inlined_call_operand.vmem [shape: f32[4,35], index: 4, kind: input, shape index: {}]
  %s5 = inlined_call_operand.hbm [shape: f32[8,128], index: 5, kind: output, shape index: {}]
  %s6 = sld [smem:[#allocation0]]
  $region30: #{tpu_custom_call.1} parent=0
    _
  %s8 = ssub.s32 1, %s6
  %s9 = scalar_select 0, %s8, %s6
  $region1: #{tpu_custom_call.1} parent=0
    #allocation2 [shape = 'u8[4096]{0}', space=vmem, size = 0x1000, scoped, tag = 'output window, operand 0, single buffered']
    #allocation3 [shape = 's32[1]{0}', space=sflag, size = 0x4, scoped, tag = 'scoped memory for tpu_custom_call.1']
    %10 = vsyncpa [#allocation3], 0
    // Predicated region
    $region2: #{tpu_custom_call.1} parent=1 // pred_check
      _
    $region3: #{tpu_custom_call.1} parent=1 // pred_check_branch
      %12 = sbr.rel (0) target = $region5
    $region4: #{tpu_custom_call.1} parent=1 // pred_region
      _
    $region5: #{tpu_custom_call.1} parent=1 // pred_fallthru
      _
    // Predicated region
    $region6: #{tpu_custom_call.1} parent=1 // pred_check
      _
    $region7: #{tpu_custom_call.1} parent=1 // pred_check_branch
      %14 = sbr.rel (0) target = $region9
    $region8: #{tpu_custom_call.1} parent=1 // pred_region
      _
    $region9: #{tpu_custom_call.1} parent=1 // pred_fallthru
      _
    // Predicated region
    $region10: #{tpu_custom_call.1} parent=1 // pred_check
      _
    $region11: #{tpu_custom_call.1} parent=1 // pred_check_branch
      %16 = sbr.rel (0) target = $region13
    $region12: #{tpu_custom_call.1} parent=1 // pred_region
      _
    $region13: #{tpu_custom_call.1} parent=1 // pred_fallthru
      _
    // Predicated region
    $region14: #{tpu_custom_call.1} parent=1 // pred_check
      _
    $region15: #{tpu_custom_call.1} parent=1 // pred_check_branch
      %18 = sbr.rel (0) target = $region17
    $region16: #{tpu_custom_call.1} parent=1 // pred_region
      _
    $region17: #{tpu_custom_call.1} parent=1 // pred_fallthru
      _
    // Predicated region
    $region18: #{tpu_custom_call.1} parent=1 // pred_check
      _
    $region19: #{tpu_custom_call.1} parent=1 // pred_check_branch
      %20 = sbr.rel (0) target = $region21
    $region20: #{tpu_custom_call.1} parent=1 // pred_region
      _
    $region21: #{tpu_custom_call.1} parent=1 // pred_fallthru
      _
    %v21 = vld [vmem:[%s3] sm:$0xff]
    %v22 = vld [vmem:[%s3 + $0x8] sm:$0xff]
    %v23 = vld [vmem:[%s3 + $0x10] sm:$0xff]
    %v24 = vld [vmem:[%s3 + $0x18] sm:$0xff]
    %v25 = vld [vmem:[%s4] sm:$0xf]
    %v26 = vld [vmem:[%s1] sm:$0x1]
    %v27 = vld [vmem:[%s2] sm:$0xff]
    %v28 = vld [vmem:[%s2 + $0x8] sm:$0xff]
    %v29 = vld [vmem:[%s2 + $0x10] sm:$0xff]
    %v30 = vld [vmem:[%s2 + $0x18] sm:$0xff]
    %v31 = vld [vmem:[%s0] sm:$0xff]
    %v32 = vld [vmem:[%s0 + $0x8] sm:$0xff]
    %v33 = vld [vmem:[%s0 + $0x10] sm:$0xff]
    %v34 = vld [vmem:[%s0 + $0x18] sm:$0xff]
    %v35 = vld [vmem:[%s0 + $0x20] sm:$0xff]
    %v36 = vld [vmem:[%s0 + $0x28] sm:$0xff]
    %v37 = vld [vmem:[%s0 + $0x30] sm:$0xff]
    %v38 = vld [vmem:[%s0 + $0x38] sm:$0xff]
    %v39 = vld [vmem:[%s0 + $0x40] sm:$0xff]
    %v40 = vld [vmem:[%s0 + $0x48] sm:$0xff]
    %v41 = vld [vmem:[%s0 + $0x50] sm:$0xff]
    %v42 = vld [vmem:[%s0 + $0x58] sm:$0xff]
    %v43 = vld [vmem:[%s0 + $0x60] sm:$0xff]
    %v44 = vld [vmem:[%s0 + $0x68] sm:$0xff]
    %v45 = vld [vmem:[%s0 + $0x70] sm:$0xff]
    %v46 = vld [vmem:[%s0 + $0x78] sm:$0xff]
    %48 = vset.pattern.permute.xlu0 0
    %49 = vperm.xlu0 %48, %v21
    %v50 = vpop.permute.xlu0 %49
    %53 = vset.pattern.permute.xlu0 0
    %54 = vperm.xlu0 %53, %v22
    %v55 = vpop.permute.xlu0 %54
    %58 = vset.pattern.permute.xlu0 0
    %59 = vperm.xlu0 %58, %v23
    %v60 = vpop.permute.xlu0 %59
    %63 = vset.pattern.permute.xlu0 0
    %64 = vperm.xlu0 %63, %v24
    %v65 = vpop.permute.xlu0 %64
    %v68 = vlaneseq
    %v69 = vshrl.u32 %v68, 7
    %v70 = vsub.s32 0, %v69
    %v71 = vrot.slane %v26, %v70
    %v73 = vmul.f32 %v50, %v71
    %v74 = vmul.f32 %v55, %v71
    %v75 = vmul.f32 %v60, %v71
    %v76 = vmul.f32 %v65, %v71
    %vm77 = vcmask 261120
    %v79 = vsel %vm77, %v27, 0
    %v82 = vsel %vm77, %v28, 0
    %v85 = vsel %vm77, %v29, 0
    %v88 = vsel %vm77, %v30, 0
    %v91 = vsel %vm77, %v31, 0
    %v94 = vsel %vm77, %v32, 0
    %v97 = vsel %vm77, %v33, 0
    %v100 = vsel %vm77, %v34, 0
    %v103 = vsel %vm77, %v35, 0
    %v106 = vsel %vm77, %v36, 0
    %v109 = vsel %vm77, %v37, 0
    %v112 = vsel %vm77, %v38, 0
    %v115 = vsel %vm77, %v39, 0
    %v118 = vsel %vm77, %v40, 0
    %v121 = vsel %vm77, %v41, 0
    %v124 = vsel %vm77, %v42, 0
    %v127 = vsel %vm77, %v43, 0
    %v130 = vsel %vm77, %v44, 0
    %v133 = vsel %vm77, %v45, 0
    %v136 = vsel %vm77, %v46, 0
    %138 = vmatprep.subr.mxu0 0.0
    %139 = vmatpush1.xpose.msra.mxu0 %v91
    %140 = vmatprep.subr.mxu0 0.0
    %141 = vmatpush1.xpose.msra.mxu0 %v94
    %142 = vmatprep.subr.mxu0 0.0
    %143 = vmatpush1.xpose.msra.mxu0 %v97
    %144 = vmatprep.subr.mxu0 0.0
    %145 = vmatpush1.xpose.msra.mxu0 %v100
    %146 = vmatprep.subr.mxu0 0.0
    %147 = vmatpush1.xpose.msra.mxu0 %v103
    %148 = vmatprep.subr.mxu0 0.0
    %149 = vmatpush1.xpose.msra.mxu0 %v106
    %150 = vmatprep.subr.mxu0 0.0
    %151 = vmatpush1.xpose.msra.mxu0 %v109
    %152 = vmatprep.subr.mxu0 0.0
    %153 = vmatpush1.xpose.msra.mxu0 %v112
    %154 = vmatprep.subr.mxu0 0.0
    %155 = vmatpush1.xpose.msra.mxu0 %v115
    %156 = vmatprep.subr.mxu0 0.0
    %157 = vmatpush1.xpose.msra.mxu0 %v118
    %158 = vmatprep.subr.mxu0 0.0
    %159 = vmatpush1.xpose.msra.mxu0 %v121
    %160 = vmatprep.subr.mxu0 0.0
    %161 = vmatpush1.xpose.msra.mxu0 %v124
    %162 = vmatprep.subr.mxu0 0.0
    %163 = vmatpush1.xpose.msra.mxu0 %v127
    %164 = vmatprep.subr.mxu0 0.0
    %165 = vmatpush1.xpose.msra.mxu0 %v130
    %166 = vmatprep.subr.mxu0 0.0
    %167 = vmatpush1.xpose.msra.mxu0 %v133
    %168 = vmatprep.subr.mxu0 0.0
    %169 = vmatpush1.xpose.msra.mxu0 %v136
    %170 = vmatprep.subr.mxu0 0.0
    %171 = vmatpush1.xpose.msra.mxu0 0.0
    %172 = vmatprep.subr.mxu0 0.0
    %173 = vmatpush1.xpose.msra.mxu0 0.0
    %174 = vmatprep.subr.mxu0 0.0
    %175 = vmatpush1.xpose.msra.mxu0 0.0
    %176 = vmatprep.subr.mxu0 0.0
    %177 = vmatpush1.xpose.msra.mxu0 0.0
    %178 = vmatprep.subr.mxu0 0.0
    %179 = vmatpush1.xpose.msra.mxu0 0.0
    %180 = vmatprep.subr.mxu0 0.0
    %181 = vmatpush1.xpose.msra.mxu0 0.0
    %182 = vmatprep.subr.mxu0 0.0
    %183 = vmatpush1.xpose.msra.mxu0 0.0
    %184 = vmatprep.subr.mxu0 0.0
    %185 = vmatpush1.xpose.msra.mxu0 0.0
    %186 = vmatprep.subr.mxu0 0.0
    %187 = vmatpush1.xpose.msra.mxu0 0.0
    %188 = vmatprep.subr.mxu0 0.0
    %189 = vmatpush1.xpose.msra.mxu0 0.0
    %190 = vmatprep.subr.mxu0 0.0
    %191 = vmatpush1.xpose.msra.mxu0 0.0
    %192 = vmatprep.subr.mxu0 0.0
    %193 = vmatpush1.xpose.msra.mxu0 0.0
    %194 = vmatprep.subr.mxu0 0.0
    %195 = vmatpush1.xpose.msra.mxu0 0.0
    %196 = vmatprep.subr.mxu0 0.0
    %197 = vmatpush1.xpose.msra.mxu0 0.0
    %198 = vmatprep.subr.mxu0 0.0
    %199 = vmatpush1.xpose.msra.mxu0 0.0
    %200 = vmatprep.subr.mxu0 0.0
    %201 = vmatpush1.xpose.msra.mxu0 0.0
    %202 = vmatprep.mubr.f32.mxu0 0.0
    %203 = vmatmul.mubr.f32.gmra.mrb[0].mxu0 %v79
    %v204 = vpop.f32.mrb[0].mxu0
    %v205 = vadd.f32 %v73, %v204
    %v206 = vpop.f32.mrb[0].mxu0
    %207 = vmatprep.mubr.f32.mxu0 0.0
    %208 = vmatmul.mubr.f32.gmra.mrb[0].mxu0 %v82
    %v209 = vpop.f32.mrb[0].mxu0
    %v210 = vadd.f32 %v74, %v209
    %v211 = vpop.f32.mrb[0].mxu0
    %212 = vmatprep.mubr.f32.mxu0 0.0
    %213 = vmatmul.mubr.f32.gmra.mrb[0].mxu0 %v85
    %v214 = vpop.f32.mrb[0].mxu0
    %v215 = vadd.f32 %v75, %v214
    %v216 = vpop.f32.mrb[0].mxu0
    %217 = vmatprep.mubr.f32.mxu0 0.0
    %218 = vmatmul.mubr.f32.gmra.mrb[0].mxu0 %v88
    %v219 = vpop.f32.mrb[0].mxu0
    %v220 = vadd.f32 %v76, %v219
    %v221 = vpop.f32.mrb[0].mxu0
    %222 = vdwg.mxu0
    %223 = vset.pattern.permute.xlu0 2
    %224 = vperm.xlu0 %223, %v21
    %v225 = vpop.permute.xlu0 %224
    %227 = vset.pattern.permute.xlu0 2
    %228 = vperm.xlu0 %227, %v22
    %v229 = vpop.permute.xlu0 %228
    %231 = vset.pattern.permute.xlu0 2
    %232 = vperm.xlu0 %231, %v23
    %v233 = vpop.permute.xlu0 %232
    %235 = vset.pattern.permute.xlu0 2
    %236 = vperm.xlu0 %235, %v24
    %v237 = vpop.permute.xlu0 %236
    %v239 = vadd.f32 %v205, %v225
    %v240 = vadd.f32 %v210, %v229
    %v241 = vadd.f32 %v215, %v233
    %v242 = vadd.f32 %v220, %v237
    %v243 = vtanh.pop %v239
    %v244 = vtanh.pop %v240
    %v245 = vtanh.pop %v241
    %v246 = vtanh.pop %v242
    %v247 = vmul.f32 %v243, %v243
    %v248 = vmul.f32 %v244, %v244
    %v249 = vmul.f32 %v245, %v245
    %v250 = vmul.f32 %v246, %v246
    %v251 = vsub.f32 1.0, %v247
    %v252 = vsub.f32 1.0, %v248
    %v253 = vsub.f32 1.0, %v249
    %v254 = vsub.f32 1.0, %v250
    %255 = vset.pattern.permute.xlu0 1
    %256 = vperm.xlu0 %255, %v21
    %v257 = vpop.permute.xlu0 %256
    %259 = vset.pattern.permute.xlu0 1
    %260 = vperm.xlu0 %259, %v22
    %v261 = vpop.permute.xlu0 %260
    %263 = vset.pattern.permute.xlu0 1
    %264 = vperm.xlu0 %263, %v23
    %v265 = vpop.permute.xlu0 %264
    %267 = vset.pattern.permute.xlu0 1
    %268 = vperm.xlu0 %267, %v24
    %v269 = vpop.permute.xlu0 %268
    %v271 = vmul.f32 %v251, %v257
    %v272 = vmul.f32 %v252, %v261
    %v273 = vmul.f32 %v253, %v265
    %v274 = vmul.f32 %v254, %v269
    %s275 = scalar_lea.vmem %s2, 32
    %v276 = vld [vmem:[%s275] sm:$0xff]
    %v277 = vld [vmem:[%s275 + $0x8] sm:$0xff]
    %v278 = vld [vmem:[%s275 + $0x10] sm:$0xff]
    %v279 = vld [vmem:[%s275 + $0x18] sm:$0xff]
    %280 = vset.pattern.permute.xlu0 3
    %281 = vperm.xlu0 %280, %v21
    %v282 = vpop.permute.xlu0 %281
    %284 = vset.pattern.permute.xlu0 3
    %285 = vperm.xlu0 %284, %v22
    %v286 = vpop.permute.xlu0 %285
    %288 = vset.pattern.permute.xlu0 3
    %289 = vperm.xlu0 %288, %v23
    %v290 = vpop.permute.xlu0 %289
    %292 = vset.pattern.permute.xlu0 3
    %293 = vperm.xlu0 %292, %v24
    %v294 = vpop.permute.xlu0 %293
    %v297 = vsel %vm77, %v276, 0
    %v300 = vsel %vm77, %v277, 0
    %v303 = vsel %vm77, %v278, 0
    %v306 = vsel %vm77, %v279, 0
    %308 = vmatprep.subr.mxu0 0.0
    %309 = vmatpush1.msra.mxu0 %v243
    %310 = vmatprep.subr.mxu0 0.0
    %311 = vmatpush1.msra.mxu0 %v244
    %312 = vmatprep.subr.mxu0 0.0
    %313 = vmatpush1.msra.mxu0 %v245
    %314 = vmatprep.subr.mxu0 0.0
    %315 = vmatpush1.msra.mxu0 %v246
    %316 = vmatprep.subr.mxu0 0.0
    %317 = vmatpush1.msra.mxu0 0.0
    %318 = vmatprep.subr.mxu0 0.0
    %319 = vmatpush1.msra.mxu0 0.0
    %320 = vmatprep.subr.mxu0 0.0
    %321 = vmatpush1.msra.mxu0 0.0
    %322 = vmatprep.subr.mxu0 0.0
    %323 = vmatpush1.msra.mxu0 0.0
    %324 = vmatprep.subr.mxu0 0.0
    %325 = vmatpush1.msra.mxu0 0.0
    %326 = vmatprep.subr.mxu0 0.0
    %327 = vmatpush1.msra.mxu0 0.0
    %328 = vmatprep.subr.mxu0 0.0
    %329 = vmatpush1.msra.mxu0 0.0
    %330 = vmatprep.subr.mxu0 0.0
    %331 = vmatpush1.msra.mxu0 0.0
    %332 = vmatprep.subr.mxu0 0.0
    %333 = vmatpush1.msra.mxu0 0.0
    %334 = vmatprep.subr.mxu0 0.0
    %335 = vmatpush1.msra.mxu0 0.0
    %336 = vmatprep.subr.mxu0 0.0
    %337 = vmatpush1.msra.mxu0 0.0
    %338 = vmatprep.subr.mxu0 0.0
    %339 = vmatpush1.msra.mxu0 0.0
    %340 = vmatprep.subr.mxu0 0.0
    %341 = vmatpush1.msra.mxu0 0.0
    %342 = vmatprep.subr.mxu0 0.0
    %343 = vmatpush1.msra.mxu0 0.0
    %344 = vmatprep.subr.mxu0 0.0
    %345 = vmatpush1.msra.mxu0 0.0
    %346 = vmatprep.subr.mxu0 0.0
    %347 = vmatpush1.msra.mxu0 0.0
    %348 = vmatprep.subr.mxu0 0.0
    %349 = vmatpush1.msra.mxu0 0.0
    %350 = vmatprep.subr.mxu0 0.0
    %351 = vmatpush1.msra.mxu0 0.0
    %352 = vmatprep.subr.mxu0 0.0
    %353 = vmatpush1.msra.mxu0 0.0
    %354 = vmatprep.subr.mxu0 0.0
    %355 = vmatpush1.msra.mxu0 0.0
    %356 = vmatprep.subr.mxu0 0.0
    %357 = vmatpush1.msra.mxu0 0.0
    %358 = vmatprep.subr.mxu0 0.0
    %359 = vmatpush1.msra.mxu0 0.0
    %360 = vmatprep.subr.mxu0 0.0
    %361 = vmatpush1.msra.mxu0 0.0
    %362 = vmatprep.subr.mxu0 0.0
    %363 = vmatpush1.msra.mxu0 0.0
    %364 = vmatprep.subr.mxu0 0.0
    %365 = vmatpush1.msra.mxu0 0.0
    %366 = vmatprep.subr.mxu0 0.0
    %367 = vmatpush1.msra.mxu0 0.0
    %368 = vmatprep.subr.mxu0 0.0
    %369 = vmatpush1.msra.mxu0 0.0
    %370 = vmatprep.subr.mxu0 0.0
    %371 = vmatpush1.msra.mxu0 0.0
    %372 = vmatprep.mubr.f32.mxu0 0.0
    %373 = vmatmul.mubr.f32.gmra.mrb[0].mxu0 %v297
    %v374 = vpop.f32.mrb[0].mxu0
    %v375 = vadd.f32 %v282, %v374
    %v376 = vpop.f32.mrb[0].mxu0
    %377 = vmatprep.mubr.f32.mxu0 0.0
    %378 = vmatmul.mubr.f32.gmra.mrb[0].mxu0 %v300
    %v379 = vpop.f32.mrb[0].mxu0
    %v380 = vadd.f32 %v286, %v379
    %v381 = vpop.f32.mrb[0].mxu0
    %382 = vmatprep.mubr.f32.mxu0 0.0
    %383 = vmatmul.mubr.f32.gmra.mrb[0].mxu0 %v303
    %v384 = vpop.f32.mrb[0].mxu0
    %v385 = vadd.f32 %v290, %v384
    %v386 = vpop.f32.mrb[0].mxu0
    %387 = vmatprep.mubr.f32.mxu0 0.0
    %388 = vmatmul.mubr.f32.gmra.mrb[0].mxu0 %v306
    %v389 = vpop.f32.mrb[0].mxu0
    %v390 = vadd.f32 %v294, %v389
    %v391 = vpop.f32.mrb[0].mxu0
    %392 = vdwg.mxu0
    %393 = vmatprep.subr.mxu0 0.0
    %394 = vmatpush1.msra.mxu0 %v271
    %395 = vmatprep.subr.mxu0 0.0
    %396 = vmatpush1.msra.mxu0 %v272
    %397 = vmatprep.subr.mxu0 0.0
    %398 = vmatpush1.msra.mxu0 %v273
    %399 = vmatprep.subr.mxu0 0.0
    %400 = vmatpush1.msra.mxu0 %v274
    %401 = vmatprep.subr.mxu0 0.0
    %402 = vmatpush1.msra.mxu0 0.0
    %403 = vmatprep.subr.mxu0 0.0
    %404 = vmatpush1.msra.mxu0 0.0
    %405 = vmatprep.subr.mxu0 0.0
    %406 = vmatpush1.msra.mxu0 0.0
    %407 = vmatprep.subr.mxu0 0.0
    %408 = vmatpush1.msra.mxu0 0.0
    %409 = vmatprep.subr.mxu0 0.0
    %410 = vmatpush1.msra.mxu0 0.0
    %411 = vmatprep.subr.mxu0 0.0
    %412 = vmatpush1.msra.mxu0 0.0
    %413 = vmatprep.subr.mxu0 0.0
    %414 = vmatpush1.msra.mxu0 0.0
    %415 = vmatprep.subr.mxu0 0.0
    %416 = vmatpush1.msra.mxu0 0.0
    %417 = vmatprep.subr.mxu0 0.0
    %418 = vmatpush1.msra.mxu0 0.0
    %419 = vmatprep.subr.mxu0 0.0
    %420 = vmatpush1.msra.mxu0 0.0
    %421 = vmatprep.subr.mxu0 0.0
    %422 = vmatpush1.msra.mxu0 0.0
    %423 = vmatprep.subr.mxu0 0.0
    %424 = vmatpush1.msra.mxu0 0.0
    %425 = vmatprep.subr.mxu0 0.0
    %426 = vmatpush1.msra.mxu0 0.0
    %427 = vmatprep.subr.mxu0 0.0
    %428 = vmatpush1.msra.mxu0 0.0
    %429 = vmatprep.subr.mxu0 0.0
    %430 = vmatpush1.msra.mxu0 0.0
    %431 = vmatprep.subr.mxu0 0.0
    %432 = vmatpush1.msra.mxu0 0.0
    %433 = vmatprep.subr.mxu0 0.0
    %434 = vmatpush1.msra.mxu0 0.0
    %435 = vmatprep.subr.mxu0 0.0
    %436 = vmatpush1.msra.mxu0 0.0
    %437 = vmatprep.subr.mxu0 0.0
    %438 = vmatpush1.msra.mxu0 0.0
    %439 = vmatprep.subr.mxu0 0.0
    %440 = vmatpush1.msra.mxu0 0.0
    %441 = vmatprep.subr.mxu0 0.0
    %442 = vmatpush1.msra.mxu0 0.0
    %443 = vmatprep.subr.mxu0 0.0
    %444 = vmatpush1.msra.mxu0 0.0
    %445 = vmatprep.subr.mxu0 0.0
    %446 = vmatpush1.msra.mxu0 0.0
    %447 = vmatprep.subr.mxu0 0.0
    %448 = vmatpush1.msra.mxu0 0.0
    %449 = vmatprep.subr.mxu0 0.0
    %450 = vmatpush1.msra.mxu0 0.0
    %451 = vmatprep.subr.mxu0 0.0
    %452 = vmatpush1.msra.mxu0 0.0
    %453 = vmatprep.subr.mxu0 0.0
    %454 = vmatpush1.msra.mxu0 0.0
    %455 = vmatprep.subr.mxu0 0.0
    %456 = vmatpush1.msra.mxu0 0.0
    %457 = vmatprep.mubr.f32.mxu0 0.0
    %458 = vmatmul.mubr.f32.gmra.mrb[0].mxu0 %v297
    %v459 = vpop.f32.mrb[0].mxu0
    %v460 = vadd.f32 0.0, %v459
    %v461 = vpop.f32.mrb[0].mxu0
    %462 = vmatprep.mubr.f32.mxu0 0.0
    %463 = vmatmul.mubr.f32.gmra.mrb[0].mxu0 %v300
    %v464 = vpop.f32.mrb[0].mxu0
    %v465 = vadd.f32 0.0, %v464
    %v466 = vpop.f32.mrb[0].mxu0
    %467 = vmatprep.mubr.f32.mxu0 0.0
    %468 = vmatmul.mubr.f32.gmra.mrb[0].mxu0 %v303
    %v469 = vpop.f32.mrb[0].mxu0
    %v470 = vadd.f32 0.0, %v469
    %v471 = vpop.f32.mrb[0].mxu0
    %472 = vmatprep.mubr.f32.mxu0 0.0
    %473 = vmatmul.mubr.f32.gmra.mrb[0].mxu0 %v306
    %v474 = vpop.f32.mrb[0].mxu0
    %v475 = vadd.f32 0.0, %v474
    %v476 = vpop.f32.mrb[0].mxu0
    %477 = vdwg.mxu0
    %v478 = vtanh.pop %v375
    %v479 = vtanh.pop %v380
    %v480 = vtanh.pop %v385
    %v481 = vtanh.pop %v390
    %v482 = vmul.f32 %v478, %v478
    %v483 = vmul.f32 %v479, %v479
    %v484 = vmul.f32 %v480, %v480
    %v485 = vmul.f32 %v481, %v481
    %v486 = vsub.f32 1.0, %v482
    %v487 = vsub.f32 1.0, %v483
    %v488 = vsub.f32 1.0, %v484
    %v489 = vsub.f32 1.0, %v485
    %v490 = vmul.f32 %v486, %v460
    %v491 = vmul.f32 %v487, %v465
    %v492 = vmul.f32 %v488, %v470
    %v493 = vmul.f32 %v489, %v475
    %495 = vset.pattern.permute.xlu0 32
    %496 = vperm.xlu0 %495, %v25
    %v497 = vpop.permute.xlu0 %496
    %v499 = vsel %vm77, %v25, 0
    %501 = vmatprep.subr.mxu0 0.0
    %502 = vmatpush1.msra.mxu0 %v478
    %503 = vmatprep.subr.mxu0 0.0
    %504 = vmatpush1.msra.mxu0 %v479
    %505 = vmatprep.subr.mxu0 0.0
    %506 = vmatpush1.msra.mxu0 %v480
    %507 = vmatprep.subr.mxu0 0.0
    %508 = vmatpush1.msra.mxu0 %v481
    %509 = vmatprep.subr.mxu0 0.0
    %510 = vmatpush1.msra.mxu0 0.0
    %511 = vmatprep.subr.mxu0 0.0
    %512 = vmatpush1.msra.mxu0 0.0
    %513 = vmatprep.subr.mxu0 0.0
    %514 = vmatpush1.msra.mxu0 0.0
    %515 = vmatprep.subr.mxu0 0.0
    %516 = vmatpush1.msra.mxu0 0.0
    %517 = vmatprep.subr.mxu0 0.0
    %518 = vmatpush1.msra.mxu0 0.0
    %519 = vmatprep.subr.mxu0 0.0
    %520 = vmatpush1.msra.mxu0 0.0
    %521 = vmatprep.subr.mxu0 0.0
    %522 = vmatpush1.msra.mxu0 0.0
    %523 = vmatprep.subr.mxu0 0.0
    %524 = vmatpush1.msra.mxu0 0.0
    %525 = vmatprep.subr.mxu0 0.0
    %526 = vmatpush1.msra.mxu0 0.0
    %527 = vmatprep.subr.mxu0 0.0
    %528 = vmatpush1.msra.mxu0 0.0
    %529 = vmatprep.subr.mxu0 0.0
    %530 = vmatpush1.msra.mxu0 0.0
    %531 = vmatprep.subr.mxu0 0.0
    %532 = vmatpush1.msra.mxu0 0.0
    %533 = vmatprep.subr.mxu0 0.0
    %534 = vmatpush1.msra.mxu0 0.0
    %535 = vmatprep.subr.mxu0 0.0
    %536 = vmatpush1.msra.mxu0 0.0
    %537 = vmatprep.subr.mxu0 0.0
    %538 = vmatpush1.msra.mxu0 0.0
    %539 = vmatprep.subr.mxu0 0.0
    %540 = vmatpush1.msra.mxu0 0.0
    %541 = vmatprep.subr.mxu0 0.0
    %542 = vmatpush1.msra.mxu0 0.0
    %543 = vmatprep.subr.mxu0 0.0
    %544 = vmatpush1.msra.mxu0 0.0
    %545 = vmatprep.subr.mxu0 0.0
    %546 = vmatpush1.msra.mxu0 0.0
    %547 = vmatprep.subr.mxu0 0.0
    %548 = vmatpush1.msra.mxu0 0.0
    %549 = vmatprep.subr.mxu0 0.0
    %550 = vmatpush1.msra.mxu0 0.0
    %551 = vmatprep.subr.mxu0 0.0
    %552 = vmatpush1.msra.mxu0 0.0
    %553 = vmatprep.subr.mxu0 0.0
    %554 = vmatpush1.msra.mxu0 0.0
    %555 = vmatprep.subr.mxu0 0.0
    %556 = vmatpush1.msra.mxu0 0.0
    %557 = vmatprep.subr.mxu0 0.0
    %558 = vmatpush1.msra.mxu0 0.0
    %559 = vmatprep.subr.mxu0 0.0
    %560 = vmatpush1.msra.mxu0 0.0
    %561 = vmatprep.subr.mxu0 0.0
    %562 = vmatpush1.msra.mxu0 0.0
    %563 = vmatprep.subr.mxu0 0.0
    %564 = vmatpush1.msra.mxu0 0.0
    %565 = vmatprep.mubr.f32.mxu0 0.0
    %566 = vmatmul.mubr.f32.gmra.mrb[0].mxu0 %v499
    %v567 = vpop.f32.mrb[0].mxu0
    %v568 = vadd.f32 %v497, %v567
    %v569 = vpop.f32.mrb[0].mxu0
    %570 = vdwg.mxu0
    %571 = vmatprep.subr.mxu0 0.0
    %572 = vmatpush1.msra.mxu0 %v490
    %573 = vmatprep.subr.mxu0 0.0
    %574 = vmatpush1.msra.mxu0 %v491
    %575 = vmatprep.subr.mxu0 0.0
    %576 = vmatpush1.msra.mxu0 %v492
    %577 = vmatprep.subr.mxu0 0.0
    %578 = vmatpush1.msra.mxu0 %v493
    %579 = vmatprep.subr.mxu0 0.0
    %580 = vmatpush1.msra.mxu0 0.0
    %581 = vmatprep.subr.mxu0 0.0
    %582 = vmatpush1.msra.mxu0 0.0
    %583 = vmatprep.subr.mxu0 0.0
    %584 = vmatpush1.msra.mxu0 0.0
    %585 = vmatprep.subr.mxu0 0.0
    %586 = vmatpush1.msra.mxu0 0.0
    %587 = vmatprep.subr.mxu0 0.0
    %588 = vmatpush1.msra.mxu0 0.0
    %589 = vmatprep.subr.mxu0 0.0
    %590 = vmatpush1.msra.mxu0 0.0
    %591 = vmatprep.subr.mxu0 0.0
    %592 = vmatpush1.msra.mxu0 0.0
    %593 = vmatprep.subr.mxu0 0.0
    %594 = vmatpush1.msra.mxu0 0.0
    %595 = vmatprep.subr.mxu0 0.0
    %596 = vmatpush1.msra.mxu0 0.0
    %597 = vmatprep.subr.mxu0 0.0
    %598 = vmatpush1.msra.mxu0 0.0
    %599 = vmatprep.subr.mxu0 0.0
    %600 = vmatpush1.msra.mxu0 0.0
    %601 = vmatprep.subr.mxu0 0.0
    %602 = vmatpush1.msra.mxu0 0.0
    %603 = vmatprep.subr.mxu0 0.0
    %604 = vmatpush1.msra.mxu0 0.0
    %605 = vmatprep.subr.mxu0 0.0
    %606 = vmatpush1.msra.mxu0 0.0
    %607 = vmatprep.subr.mxu0 0.0
    %608 = vmatpush1.msra.mxu0 0.0
    %609 = vmatprep.subr.mxu0 0.0
    %610 = vmatpush1.msra.mxu0 0.0
    %611 = vmatprep.subr.mxu0 0.0
    %612 = vmatpush1.msra.mxu0 0.0
    %613 = vmatprep.subr.mxu0 0.0
    %614 = vmatpush1.msra.mxu0 0.0
    %615 = vmatprep.subr.mxu0 0.0
    %616 = vmatpush1.msra.mxu0 0.0
    %617 = vmatprep.subr.mxu0 0.0
    %618 = vmatpush1.msra.mxu0 0.0
    %619 = vmatprep.subr.mxu0 0.0
    %620 = vmatpush1.msra.mxu0 0.0
    %621 = vmatprep.subr.mxu0 0.0
    %622 = vmatpush1.msra.mxu0 0.0
    %623 = vmatprep.subr.mxu0 0.0
    %624 = vmatpush1.msra.mxu0 0.0
    %625 = vmatprep.subr.mxu0 0.0
    %626 = vmatpush1.msra.mxu0 0.0
    %627 = vmatprep.subr.mxu0 0.0
    %628 = vmatpush1.msra.mxu0 0.0
    %629 = vmatprep.subr.mxu0 0.0
    %630 = vmatpush1.msra.mxu0 0.0
    %631 = vmatprep.subr.mxu0 0.0
    %632 = vmatpush1.msra.mxu0 0.0
    %633 = vmatprep.subr.mxu0 0.0
    %634 = vmatpush1.msra.mxu0 0.0
    %635 = vmatprep.mubr.f32.mxu0 0.0
    %636 = vmatmul.mubr.f32.gmra.mrb[0].mxu0 %v499
    %v637 = vpop.f32.mrb[0].mxu0
    %v638 = vadd.f32 0.0, %v637
    %v639 = vpop.f32.mrb[0].mxu0
    %640 = vdwg.mxu0
    %v641 = vand.u32 2147483647, %v568
    %v642 = vsub.f32 0.0, %v641
    %v643 = vmul.f32 %v642, 1.442695
    %v644 = vpow.pop %v643
    %v645 = vmax.f32 %v568, 0.0
    %v646 = vadd.f32 %v644, 1.0
    %v647 = vlog2.pop %v646
    %v648 = vmul.f32 %v647, 0.6931472
    %v649 = vmul.f32 -0.5, %v644
    %v650 = vadd.f32 %v649, 1.0
    %v651 = vmul.f32 %v650, %v644
    %v652 = vand.u32 2147483647, %v644
    %vm653 = vcmp.lt.f32.partialorder %v652, 0.0004427343
    %v654 = vsel %vm653, %v651, %v648
    %v655 = vadd.f32 %v645, %v654
    %v656 = vadd.f32 %v644, 1.0
    %v657 = vrcp.pop %v656
    %v658 = vmul.f32 1.0, %v657
    %vm659 = vcmp.ge.f32.partialorder %v568, 0.0
    %v660 = vmul.f32 %v644, %v658
    %v661 = vsel %vm659, %v658, %v660
    %662 = vset.pattern.permute.xlu0 33
    %663 = vperm.xlu0 %662, %v25
    %v664 = vpop.permute.xlu0 %663
    %v666 = vmul.f32 %v664, %v71
    %v667 = vadd.f32 %v655, %v666
    %v668 = vmul.f32 %v661, %v638
    %669 = vset.pattern.permute.xlu0 34
    %670 = vperm.xlu0 %669, %v25
    %v671 = vpop.permute.xlu0 %670
    %v673 = vadd.f32 %v668, %v671
    %v675 = vrot.slane %v673, 4
    %vm677 = vcmask 1043456
    %v678 = vsel %vm677, %v667, %v675
    %679 = vst [vmem:[#allocation2] sm:$0xff] %v678
    // Predicated region
    $region22: #{tpu_custom_call.1} parent=1 // pred_check
      _
    $region23: #{tpu_custom_call.1} parent=1 // pred_check_branch
      %681 = sbr.rel (0) target = $region25
    $region24: #{tpu_custom_call.1} parent=1 // pred_region
      %s683 = ssub.s32 128, 128
      %684 = vsyncadd [#allocation3], %s683
      %s686 = sshll.u32 [#allocation2], 4
      %s687 = int_to_ptr.vmem [resolvable:$true] %s686
      %689 = dma.vmem_to_hbm [thread:$0]  %s687, 128, %s5, [#allocation3]
    $region25: #{tpu_custom_call.1} parent=1 // pred_fallthru
      _
    // Predicated region
    $region26: #{tpu_custom_call.1} parent=1 // pred_check
      _
    $region27: #{tpu_custom_call.1} parent=1 // pred_check_branch
      %691 = sbr.rel (0) target = $region29
    $region28: #{tpu_custom_call.1} parent=1 // pred_region
      %692 = dma.done [#allocation3], 128
    $region29: #{tpu_custom_call.1} parent=1 // pred_fallthru
      _
    %693 = vsyncpa [#allocation3], 1

</llo_original>
